<compile_context>
chip_gen: v5e
topology: v5e:2x2
jax: 0.10.0
libtpu: 0.0.40
codegen_flags: <defaults>
</compile_context>

<pallas_src>
import jax
import jax.numpy as jnp
from jax.experimental import pallas as pl
from jax.experimental.pallas import tpu as pltpu

STATE_DIM = 5                                  # from the module (state_dim = 5)
NUM_ASSETS = 4                                 # synthetic; action_dim = num_assets*(num_assets-1)
ACTION_DIM = NUM_ASSETS * (NUM_ASSETS - 1)     # = 12
HIDDEN = 128
BATCH = 8

X_PAD = 16       # state_dim padded to one bf16 sublane tile
OUT_PAD = 128    # lane-dense output width; q lives in columns [0, ACTION_DIM)
TILE_CAP = 1024  # max rows per grid step (VMEM stays tiny well past this)

# Row offsets inside the packed 128-lane weight slab (all 16-aligned for bf16 tiling).
_R_W1 = 0                          # w1 (zero-padded rows), rows [0, 16)
_R_W2 = _R_W1 + X_PAD              # w2,                    rows [16, 144)
_R_WQ = _R_W2 + HIDDEN             # fused dueling head,    rows [144, 400)
_SLAB_ROWS = _R_WQ + 2 * HIDDEN    # 400


def dueling_dqn_kernel(x_ref, w_ref, wh1_ref, b_ref, out_ref):
    # x_ref:   (TB, 16)   bf16  -- [state(5), zeros]
    # w_ref:   (400, 128) bf16  -- [w1 ; w2 ; wq] (wq has the dueling fold)
    # wh1_ref: (128, 256) bf16  -- [wv1 | wa1]
    # b_ref:   (8, 256)   f32   -- rows: 0=b2 | 1=bh1 | 2=bq | 3=b1
    x = x_ref[...]

    w1 = w_ref[_R_W1:_R_W2, :]
    w2 = w_ref[_R_W2:_R_WQ, :]
    wq = w_ref[_R_WQ:_SLAB_ROWS, :]
    wh1 = wh1_ref[...]

    b2 = b_ref[0:1, 0:HIDDEN]
    bh1 = b_ref[1:2, :]
    bq = b_ref[2:3, 0:HIDDEN]
    b1 = b_ref[3:4, 0:HIDDEN]

    # features[0]: Linear(state_dim, 128) + ReLU
    h = jnp.dot(x, w1, preferred_element_type=jnp.float32) + b1
    h = jnp.maximum(h, 0.0)

    # features[2]: Linear(128, 128) + ReLU
    h = jnp.dot(h.astype(jnp.bfloat16), w2, preferred_element_type=jnp.float32) + b2
    h = jnp.maximum(h, 0.0)

    # fused value/adv hidden layer: [Linear(128,128)+ReLU | Linear(128,128)+ReLU]
    hh = jnp.dot(h.astype(jnp.bfloat16), wh1, preferred_element_type=jnp.float32) + bh1
    hh = jnp.maximum(hh, 0.0)

    # fused dueling head: q = V + (A - mean(A)) already folded into wq / bq
    q = jnp.dot(hh.astype(jnp.bfloat16), wq, preferred_element_type=jnp.float32) + bq
    out_ref[...] = q.astype(out_ref.dtype)   # bf16 store: halves output HBM traffic


def _round_up(n, m):
    return ((n + m - 1) // m) * m


def _pick_tile(batch):
    """Batch tile: full batch for tiny inference batches; >=2 grid steps and
    a 1024-row cap otherwise (v7x shards the 'parallel' axis over its 2 TCs)."""
    b8 = _round_up(batch, 8)
    if b8 <= 16:
        return b8, b8
    tile_b = min(TILE_CAP, _round_up((b8 + 1) // 2, 16))   # 16-aligned for bf16 sublanes
    b_pad = _round_up(b8, tile_b)
    return tile_b, b_pad


@jax.jit
def dueling_dqn_forward_padded(x, prepared):
    """Hot path: x (batch, state_dim) f32 -> padded lane-dense q (b_pad, 128) bf16.

    Valid Q-values live at out[:batch, :ACTION_DIM]; padded rows contain
    bias-driven garbage (zero inputs) and padded columns are bias-free zeros.
    Consumers should index the slab directly rather than materializing a slice.
    """
    w_slab, wh1, bias_slab = prepared
    batch, state_dim = x.shape
    tile_b, b_pad = _pick_tile(batch)

    # Single pad + cast (no scatter updates): layer-1 bias is added in-kernel.
    xp = jnp.pad(x, ((0, b_pad - batch), (0, X_PAD - state_dim))).astype(jnp.bfloat16)

    return pl.pallas_call(
        dueling_dqn_kernel,
        out_shape=jax.ShapeDtypeStruct((b_pad, OUT_PAD), jnp.bfloat16),
        grid=(b_pad // tile_b,),
        in_specs=[
            pl.BlockSpec((tile_b, X_PAD), lambda i: (i, 0)),   # activations pipeline over batch
            pl.BlockSpec(w_slab.shape, lambda i: (0, 0)),      # weights stay VMEM-resident
            pl.BlockSpec(wh1.shape, lambda i: (0, 0)),
            pl.BlockSpec(bias_slab.shape, lambda i: (0, 0)),
        ],
        out_specs=pl.BlockSpec((tile_b, OUT_PAD), lambda i: (i, 0)),  # lane-dense bf16 store
        compiler_params=pltpu.CompilerParams(
            dimension_semantics=("parallel",)),   # shards batch across v7x's 2 TCs
    )(xp, w_slab, wh1, bias_slab)


def dueling_dqn_forward(x, prepared):
    """Convenience wrapper matching the PyTorch module's output shape.
    (Prefer dueling_dqn_forward_padded in a latency-critical loop.)"""
    out = dueling_dqn_forward_padded(x, prepared)
    return out[:x.shape[0], :ACTION_DIM]


def init_linear_params(key, fan_in, fan_out):
    """PyTorch-style nn.Linear init: U(-1/sqrt(fan_in), 1/sqrt(fan_in)).
    Weight returned transposed as (fan_in, fan_out); bias as (1, fan_out)."""
    k_w, k_b = jax.random.split(key)
    bound = 1.0 / jnp.sqrt(jnp.float32(fan_in))
    w = jax.random.uniform(k_w, (fan_in, fan_out), jnp.float32, -bound, bound)
    b = jax.random.uniform(k_b, (1, fan_out), jnp.float32, -bound, bound)
    return w, b


def init_dueling_dqn_params(key, state_dim, action_dim, hidden=HIDDEN):
    keys = jax.random.split(key, 6)
    w1, b1 = init_linear_params(keys[0], state_dim, hidden)
    w2, b2 = init_linear_params(keys[1], hidden, hidden)
    wv1, bv1 = init_linear_params(keys[2], hidden, hidden)
    wv2, bv2 = init_linear_params(keys[3], hidden, 1)
    wa1, ba1 = init_linear_params(keys[4], hidden, hidden)
    wa2, ba2 = init_linear_params(keys[5], hidden, action_dim)
    return (w1, b1, w2, b2, wv1, bv1, wv2, bv2, wa1, ba1, wa2, ba2)


def prepare_params(params):
    """One-time host-side fusion/packing of the 12 Linear params into the
    3 arrays the kernel consumes (exact in real arithmetic; bf16-rounded;
    the mean-subtraction identity in the folded head holds to bf16 precision)."""
    (w1, b1, w2, b2, wv1, bv1, wv2, bv2, wa1, ba1, wa2, ba2) = params
    state_dim, hidden = w1.shape
    action_dim = wa2.shape[1]

    # layer 1: zero-pad the weight rows to X_PAD (bias stays separate, added in-kernel)
    w1p = jnp.zeros((X_PAD, hidden), jnp.float32)
    w1p = w1p.at[:state_dim].set(w1)

    # fused value/adv hidden layer
    wh1 = jnp.concatenate([wv1, wa1], axis=1)            # (128, 256)
    bh1 = jnp.concatenate([bv1, ba1], axis=1)            # (1, 256)

    # fused dueling head with mean-subtraction + value broadcast folded in:
    #   q[:, j] = hv @ wv2 + bv2 + ha @ (wa2[:, j] - mean_j wa2) + (ba2[j] - mean ba2)
    wa2_c = wa2 - wa2.mean(axis=1, keepdims=True)
    ba2_c = ba2 - ba2.mean(axis=1, keepdims=True)
    wq = jnp.zeros((2 * hidden, OUT_PAD), jnp.float32)
    wq = wq.at[:hidden, :action_dim].set(jnp.broadcast_to(wv2, (hidden, action_dim)))
    wq = wq.at[hidden:, :action_dim].set(wa2_c)
    bq = jnp.zeros((1, OUT_PAD), jnp.float32)
    bq = bq.at[:, :action_dim].set(bv2 + ba2_c)

    # pack: one 128-lane bf16 slab, one 256-lane bf16 slab, one f32 bias slab
    w_slab = jnp.concatenate([w1p, w2, wq], axis=0).astype(jnp.bfloat16)   # (400, 128)
    wh1_b = wh1.astype(jnp.bfloat16)                                       # (128, 256)
    bias_slab = jnp.zeros((8, 2 * hidden), jnp.float32)
    bias_slab = bias_slab.at[0, :hidden].set(b2[0])
    bias_slab = bias_slab.at[1, :].set(bh1[0])
    bias_slab = bias_slab.at[2, :hidden].set(bq[0])
    bias_slab = bias_slab.at[3, :hidden].set(b1[0])
    return w_slab, wh1_b, bias_slab


def dueling_dqn_reference(x, params):
    """Original f32 dueling formulation (matches the PyTorch module)."""
    (w1, b1, w2, b2, wv1, bv1, wv2, bv2, wa1, ba1, wa2, ba2) = params
    h = jnp.maximum(x @ w1 + b1, 0.0)
    h = jnp.maximum(h @ w2 + b2, 0.0)
    v = jnp.maximum(h @ wv1 + bv1, 0.0) @ wv2 + bv2
    a = jnp.maximum(h @ wa1 + ba1, 0.0) @ wa2 + ba2
    return v + (a - a.mean(axis=1, keepdims=True))


def dueling_dqn_emulation(x, prepared):
    """Plain-JAX emulation of the exact fused / bf16 math the kernel runs."""
    w_slab, wh1, bias_slab = prepared
    batch, state_dim = x.shape
    xp = jnp.pad(x, ((0, 0), (0, X_PAD - state_dim))).astype(jnp.bfloat16)

    w1 = w_slab[_R_W1:_R_W2]
    w2 = w_slab[_R_W2:_R_WQ]
    wq = w_slab[_R_WQ:_SLAB_ROWS]
    b2 = bias_slab[0:1, :HIDDEN]
    bh1 = bias_slab[1:2, :]
    bq = bias_slab[2:3, :HIDDEN]
    b1 = bias_slab[3:4, :HIDDEN]

    h = jnp.maximum(jnp.dot(xp, w1, preferred_element_type=jnp.float32) + b1, 0.0)
    h = jnp.maximum(jnp.dot(h.astype(jnp.bfloat16), w2,
                            preferred_element_type=jnp.float32) + b2, 0.0)
    hh = jnp.maximum(jnp.dot(h.astype(jnp.bfloat16), wh1,
                             preferred_element_type=jnp.float32) + bh1, 0.0)
    q = jnp.dot(hh.astype(jnp.bfloat16), wq, preferred_element_type=jnp.float32) + bq
    return q.astype(jnp.bfloat16)[:, :ACTION_DIM]


if __name__ == "__main__":
    key = jax.random.PRNGKey(0)
    k_params, k_x = jax.random.split(key)

    params = init_dueling_dqn_params(k_params, STATE_DIM, ACTION_DIM)
    prepared = prepare_params(params)
    x = jax.random.normal(k_x, (BATCH, STATE_DIM), dtype=jnp.float32)

    out = dueling_dqn_forward_padded(x, prepared)
    out = jax.block_until_ready(out)
    assert out.dtype == jnp.bfloat16
    assert out.shape[1] == OUT_PAD and out.shape[0] >= BATCH

    q = out[:BATCH, :ACTION_DIM]                 # consumer-side indexing of the padded slab
    assert q.shape == (BATCH, ACTION_DIM)

    # Tight check: kernel vs plain-JAX emulation of the identical fused bf16 math.
    q_emul = dueling_dqn_emulation(x, prepared)
    assert jnp.allclose(q.astype(jnp.float32), q_emul.astype(jnp.float32),
                        atol=1e-2, rtol=1e-2), "mismatch vs fused-math emulation"

    # Semantic check: matches the original f32 dueling formulation up to bf16 precision.
    q_f32 = dueling_dqn_reference(x, params)
    assert jnp.allclose(q.astype(jnp.float32), q_f32,
                        atol=5e-2, rtol=5e-2), "mismatch vs f32 dueling reference"

    print("KERNEL_OK")
</pallas_src>

<mosaic_0001>
module attributes {stable_mosaic.version = 11 : i64} {
  func.func @dueling_dqn_kernel(%arg0: i32, %arg1: memref<8x16xbf16, #tpu.memory_space<vmem>>, %arg2: memref<400x128xbf16, #tpu.memory_space<vmem>>, %arg3: memref<128x256xbf16, #tpu.memory_space<vmem>>, %arg4: memref<8x256xf32, #tpu.memory_space<vmem>>, %arg5: memref<8x128xbf16, #tpu.memory_space<vmem>>) attributes {dimension_semantics = [#tpu.dimension_semantics<parallel>], iteration_bounds = array<i64: 1>, scalar_prefetch = 0 : i64, scratch_operands = 0 : i64, tpu.core_type = #tpu.core_type<tc>, window_params = [{transform_indices = @transform_0, window_bounds = array<i64: 8, 16>}, {pipeline_mode = #tpu.pipeline_mode<synchronous>, transform_indices = @transform_1, window_bounds = array<i64: 400, 128>}, {pipeline_mode = #tpu.pipeline_mode<synchronous>, transform_indices = @transform_2, window_bounds = array<i64: 128, 256>}, {pipeline_mode = #tpu.pipeline_mode<synchronous>, transform_indices = @transform_3, window_bounds = array<i64: 8, 256>}, {transform_indices = @transform_4, window_bounds = array<i64: 8, 128>}]} {
    %c0 = arith.constant 0 : index
    %c0_0 = arith.constant 0 : index
    %0 = vector.load %arg1[%c0, %c0_0] : memref<8x16xbf16, #tpu.memory_space<vmem>>, vector<8x16xbf16>
    %c0_1 = arith.constant 0 : index
    %c0_2 = arith.constant 0 : index
    %1 = vector.load %arg2[%c0_1, %c0_2] : memref<400x128xbf16, #tpu.memory_space<vmem>>, vector<16x128xbf16>
    %c16 = arith.constant 16 : index
    %c0_3 = arith.constant 0 : index
    %2 = vector.load %arg2[%c16, %c0_3] : memref<400x128xbf16, #tpu.memory_space<vmem>>, vector<128x128xbf16>
    %c144 = arith.constant 144 : index
    %c0_4 = arith.constant 0 : index
    %3 = vector.load %arg2[%c144, %c0_4] : memref<400x128xbf16, #tpu.memory_space<vmem>>, vector<256x128xbf16>
    %c0_5 = arith.constant 0 : index
    %c0_6 = arith.constant 0 : index
    %4 = vector.load %arg3[%c0_5, %c0_6] : memref<128x256xbf16, #tpu.memory_space<vmem>>, vector<128x256xbf16>
    %c0_7 = arith.constant 0 : index
    %c0_8 = arith.constant 0 : index
    %5 = vector.load %arg4[%c0_7, %c0_8] : memref<8x256xf32, #tpu.memory_space<vmem>>, vector<1x128xf32>
    %c1 = arith.constant 1 : index
    %c0_9 = arith.constant 0 : index
    %6 = vector.load %arg4[%c1, %c0_9] : memref<8x256xf32, #tpu.memory_space<vmem>>, vector<1x256xf32>
    %c2 = arith.constant 2 : index
    %c0_10 = arith.constant 0 : index
    %7 = vector.load %arg4[%c2, %c0_10] : memref<8x256xf32, #tpu.memory_space<vmem>>, vector<1x128xf32>
    %c3 = arith.constant 3 : index
    %c0_11 = arith.constant 0 : index
    %8 = vector.load %arg4[%c3, %c0_11] : memref<8x256xf32, #tpu.memory_space<vmem>>, vector<1x128xf32>
    %cst = arith.constant dense<0.000000e+00> : vector<8x128xf32>
    %9 = tpu.matmul %0, %1, %cst {dimension_numbers = #tpu.dot_dimension_numbers<[1], [0], [0], [1], [0, 0, 1, 1], [], []>} : vector<8x16xbf16>, vector<16x128xbf16>, vector<8x128xf32> -> vector<8x128xf32>
    %10 = vector.broadcast %8 : vector<1x128xf32> to vector<8x128xf32>
    %11 = arith.addf %9, %10 : vector<8x128xf32>
    %cst_12 = arith.constant 0.000000e+00 : f32
    %12 = vector.broadcast %cst_12 : f32 to vector<8x128xf32>
    %13 = arith.maximumf %11, %12 : vector<8x128xf32>
    %14 = arith.truncf %13 : vector<8x128xf32> to vector<8x128xbf16>
    %cst_13 = arith.constant dense<0.000000e+00> : vector<8x128xf32>
    %15 = tpu.matmul %14, %2, %cst_13 {dimension_numbers = #tpu.dot_dimension_numbers<[1], [0], [0], [1], [0, 0, 1, 1], [], []>} : vector<8x128xbf16>, vector<128x128xbf16>, vector<8x128xf32> -> vector<8x128xf32>
    %16 = vector.broadcast %5 : vector<1x128xf32> to vector<8x128xf32>
    %17 = arith.addf %15, %16 : vector<8x128xf32>
    %cst_14 = arith.constant 0.000000e+00 : f32
    %18 = vector.broadcast %cst_14 : f32 to vector<8x128xf32>
    %19 = arith.maximumf %17, %18 : vector<8x128xf32>
    %20 = arith.truncf %19 : vector<8x128xf32> to vector<8x128xbf16>
    %cst_15 = arith.constant dense<0.000000e+00> : vector<8x256xf32>
    %21 = tpu.matmul %20, %4, %cst_15 {dimension_numbers = #tpu.dot_dimension_numbers<[1], [0], [0], [1], [0, 0, 1, 1], [], []>} : vector<8x128xbf16>, vector<128x256xbf16>, vector<8x256xf32> -> vector<8x256xf32>
    %22 = vector.broadcast %6 : vector<1x256xf32> to vector<8x256xf32>
    %23 = arith.addf %21, %22 : vector<8x256xf32>
    %cst_16 = arith.constant 0.000000e+00 : f32
    %24 = vector.broadcast %cst_16 : f32 to vector<8x256xf32>
    %25 = arith.maximumf %23, %24 : vector<8x256xf32>
    %26 = arith.truncf %25 : vector<8x256xf32> to vector<8x256xbf16>
    %cst_17 = arith.constant dense<0.000000e+00> : vector<8x128xf32>
    %27 = tpu.matmul %26, %3, %cst_17 {dimension_numbers = #tpu.dot_dimension_numbers<[1], [0], [0], [1], [0, 0, 1, 1], [], []>} : vector<8x256xbf16>, vector<256x128xbf16>, vector<8x128xf32> -> vector<8x128xf32>
    %28 = vector.broadcast %7 : vector<1x128xf32> to vector<8x128xf32>
    %29 = arith.addf %27, %28 : vector<8x128xf32>
    %30 = arith.truncf %29 : vector<8x128xf32> to vector<8x128xbf16>
    %c0_18 = arith.constant 0 : index
    %c0_19 = arith.constant 0 : index
    %31 = vector.load %arg5[%c0_18, %c0_19] : memref<8x128xbf16, #tpu.memory_space<vmem>>, vector<8x128xbf16>
    tpu.vector_store %arg5[%c0_18, %c0_19], %30 {strides = array<i32>} : memref<8x128xbf16, #tpu.memory_space<vmem>>, vector<8x128xbf16>,
    return
  }
  func.func @transform_0(%arg0: i32) -> (i32, i32) {
    %c0_i32 = arith.constant 0 : i32
    %c0_i32_0 = arith.constant 0 : i32
    return %arg0, %c0_i32 : i32, i32
  }
  func.func @transform_1(%arg0: i32) -> (i32, i32) {
    %c0_i32 = arith.constant 0 : i32
    %c0_i32_0 = arith.constant 0 : i32
    %c0_i32_1 = arith.constant 0 : i32
    return %c0_i32, %c0_i32_0 : i32, i32
  }
  func.func @transform_2(%arg0: i32) -> (i32, i32) {
    %c0_i32 = arith.constant 0 : i32
    %c0_i32_0 = arith.constant 0 : i32
    %c0_i32_1 = arith.constant 0 : i32
    return %c0_i32, %c0_i32_0 : i32, i32
  }
  func.func @transform_3(%arg0: i32) -> (i32, i32) {
    %c0_i32 = arith.constant 0 : i32
    %c0_i32_0 = arith.constant 0 : i32
    %c0_i32_1 = arith.constant 0 : i32
    return %c0_i32, %c0_i32_0 : i32, i32
  }
  func.func @transform_4(%arg0: i32) -> (i32, i32) {
    %c0_i32 = arith.constant 0 : i32
    %c0_i32_0 = arith.constant 0 : i32
    return %arg0, %c0_i32 : i32, i32
  }
}

</mosaic_0001>

<llo_original>
// kernel: dueling_dqn_forward_padded.1
$region0: #{dueling_dqn_forward_padded.1}
  #allocation0 [shape = 'u32[]', space=smem, size = 0x4, offset = 0x4, fixed_abs, tag = 'smem constant byte address 0x4 - core index']
  #allocation1 [shape = 'u32[72,128]{1,0:T(1,128)}', space=vmem, size = 0x9000, scoped, tag = 'internal scratch']
  %s0 = inlined_call_operand.vmem [shape: bf16[8,16], index: 0, kind: input, shape index: {}]
  %s1 = inlined_call_operand.hbm [shape: bf16[400,128], index: 1, kind: input, shape index: {}]
  %s2 = inlined_call_operand.hbm [shape: bf16[128,256], index: 2, kind: input, shape index: {}]
  %s3 = inlined_call_operand.vmem [shape: f32[8,256], index: 3, kind: input, shape index: {}]
  %s4 = inlined_call_operand.hbm [shape: bf16[8,128], index: 4, kind: output, shape index: {}]
  %s5 = sld [smem:[#allocation0]]
  $region34: #{dueling_dqn_forward_padded.1} parent=0
    _
  %s7 = ssub.s32 1, %s5
  %s8 = scalar_select 0, %s7, %s5
  $region1: #{dueling_dqn_forward_padded.1} parent=0
    #allocation2 [shape = 'u8[102400]{0}', space=vmem, size = 0x19000, scoped, tag = 'input window, operand 1, single buffered']
    #allocation3 [shape = 's32[1]{0}', space=sflag, size = 0x4, scoped, tag = 'scoped memory for dueling_dqn_forward_padded.1']
    #allocation4 [shape = 's32[1]{0}', space=sflag, size = 0x4, scoped, tag = 'scoped memory for dueling_dqn_forward_padded.1']
    #allocation5 [shape = 'u8[65536]{0}', space=vmem, size = 0x10000, scoped, tag = 'input window, operand 2, single buffered']
    #allocation6 [shape = 's32[1]{0}', space=sflag, size = 0x4, scoped, tag = 'scoped memory for dueling_dqn_forward_padded.1']
    #allocation7 [shape = 'u8[2048]{0}', space=vmem, size = 0x800, scoped, tag = 'output window, operand 0, single buffered']
    %9 = vsyncpa [#allocation3], 0
    %10 = vsyncpa [#allocation6], 0
    %11 = vsyncpa [#allocation4], 0
    // Predicated region
    $region2: #{dueling_dqn_forward_padded.1} parent=1 // pred_check
      _
    $region3: #{dueling_dqn_forward_padded.1} parent=1 // pred_check_branch
      %13 = sbr.rel (0) target = $region5
    $region4: #{dueling_dqn_forward_padded.1} parent=1 // pred_region
      _
    $region5: #{dueling_dqn_forward_padded.1} parent=1 // pred_fallthru
      _
    // Predicated region
    $region6: #{dueling_dqn_forward_padded.1} parent=1 // pred_check
      _
    $region7: #{dueling_dqn_forward_padded.1} parent=1 // pred_check_branch
      %15 = sbr.rel (0) target = $region9
    $region8: #{dueling_dqn_forward_padded.1} parent=1 // pred_region
      %17 = vsyncadd [#allocation3], 0
      %s18 = sshll.u32 %s1, 4
      %s19 = int_to_ptr.hbm [resolvable:$true] %s18
      %s20 = sshll.u32 [#allocation2], 4
      %s21 = int_to_ptr.vmem [resolvable:$true] %s20
      %26 = dma.hbm_to_vmem [thread:$0]  %s19, 3200, %s21, [#allocation3], 64, 64, 4
    $region9: #{dueling_dqn_forward_padded.1} parent=1 // pred_fallthru
      _
    // Predicated region
    $region10: #{dueling_dqn_forward_padded.1} parent=1 // pred_check
      _
    $region11: #{dueling_dqn_forward_padded.1} parent=1 // pred_check_branch
      %28 = sbr.rel (0) target = $region13
    $region12: #{dueling_dqn_forward_padded.1} parent=1 // pred_region
      %30 = vsyncadd [#allocation6], 0
      %s31 = sshll.u32 %s2, 4
      %s32 = int_to_ptr.hbm [resolvable:$true] %s31
      %s33 = sshll.u32 [#allocation5], 4
      %s34 = int_to_ptr.vmem [resolvable:$true] %s33
      %39 = dma.hbm_to_vmem [thread:$0]  %s32, 2048, %s34, [#allocation6], 128, 128, 8
    $region13: #{dueling_dqn_forward_padded.1} parent=1 // pred_fallthru
      _
    // Predicated region
    $region14: #{dueling_dqn_forward_padded.1} parent=1 // pred_check
      _
    $region15: #{dueling_dqn_forward_padded.1} parent=1 // pred_check_branch
      %41 = sbr.rel (0) target = $region17
    $region16: #{dueling_dqn_forward_padded.1} parent=1 // pred_region
      _
    $region17: #{dueling_dqn_forward_padded.1} parent=1 // pred_fallthru
      _
    // Predicated region
    $region18: #{dueling_dqn_forward_padded.1} parent=1 // pred_check
      _
    $region19: #{dueling_dqn_forward_padded.1} parent=1 // pred_check_branch
      %43 = sbr.rel (0) target = $region21
    $region20: #{dueling_dqn_forward_padded.1} parent=1 // pred_region
      %45 = dma.done [#allocation3], 3200
    $region21: #{dueling_dqn_forward_padded.1} parent=1 // pred_fallthru
      _
    // Predicated region
    $region22: #{dueling_dqn_forward_padded.1} parent=1 // pred_check
      _
    $region23: #{dueling_dqn_forward_padded.1} parent=1 // pred_check_branch
      %47 = sbr.rel (0) target = $region25
    $region24: #{dueling_dqn_forward_padded.1} parent=1 // pred_region
      %49 = dma.done [#allocation6], 2048
    $region25: #{dueling_dqn_forward_padded.1} parent=1 // pred_fallthru
      _
    %v51 = vld [vmem:[%s0] sm:$0xf]
    %v52 = vld [vmem:[#allocation2] sm:$0xf]
    %v53 = vld [vmem:[#allocation2 + $0x4] sm:$0xf]
    %v54 = vld [vmem:[#allocation2 + $0x8] sm:$0xf]
    %v55 = vld [vmem:[#allocation2 + $0xc] sm:$0xf]
    %v56 = vld [vmem:[#allocation2 + $0x10] sm:$0xf]
    %v57 = vld [vmem:[#allocation2 + $0x14] sm:$0xf]
    %v58 = vld [vmem:[#allocation2 + $0x18] sm:$0xf]
    %v59 = vld [vmem:[#allocation2 + $0x1c] sm:$0xf]
    %v60 = vld [vmem:[#allocation2 + $0x20] sm:$0xf]
    %v61 = vld [vmem:[#allocation2 + $0x24] sm:$0xf]
    %v62 = vld [vmem:[#allocation2 + $0x28] sm:$0xf]
    %v63 = vld [vmem:[#allocation2 + $0x2c] sm:$0xf]
    %v64 = vld [vmem:[#allocation2 + $0x30] sm:$0xf]
    %v65 = vld [vmem:[#allocation2 + $0x34] sm:$0xf]
    %v66 = vld [vmem:[#allocation2 + $0x38] sm:$0xf]
    %v67 = vld [vmem:[#allocation2 + $0x3c] sm:$0xf]
    %v68 = vld [vmem:[#allocation2 + $0x40] sm:$0xf]
    %v69 = vld [vmem:[#allocation2 + $0x44] sm:$0xf]
    %v70 = vld [vmem:[#allocation2 + $0x48] sm:$0xf]
    %v71 = vld [vmem:[#allocation2 + $0x4c] sm:$0xf]
    %v72 = vld [vmem:[#allocation2 + $0x50] sm:$0xf]
    %v73 = vld [vmem:[#allocation2 + $0x54] sm:$0xf]
    %v74 = vld [vmem:[#allocation2 + $0x58] sm:$0xf]
    %v75 = vld [vmem:[#allocation2 + $0x5c] sm:$0xf]
    %v76 = vld [vmem:[#allocation2 + $0x60] sm:$0xf]
    %v77 = vld [vmem:[#allocation2 + $0x64] sm:$0xf]
    %v78 = vld [vmem:[#allocation2 + $0x68] sm:$0xf]
    %v79 = vld [vmem:[#allocation2 + $0x6c] sm:$0xf]
    %v80 = vld [vmem:[#allocation2 + $0x70] sm:$0xf]
    %v81 = vld [vmem:[#allocation2 + $0x74] sm:$0xf]
    %v82 = vld [vmem:[#allocation2 + $0x78] sm:$0xf]
    %v83 = vld [vmem:[#allocation2 + $0x7c] sm:$0xf]
    %v84 = vld [vmem:[#allocation2 + $0x80] sm:$0xf]
    %v85 = vld [vmem:[#allocation2 + $0x84] sm:$0xf]
    %v86 = vld [vmem:[#allocation2 + $0x88] sm:$0xf]
    %v87 = vld [vmem:[#allocation2 + $0x8c] sm:$0xf]
    %v88 = vld [vmem:[#allocation2 + $0x90] sm:$0xf]
    %v89 = vld [vmem:[#allocation2 + $0x94] sm:$0xf]
    %v90 = vld [vmem:[#allocation2 + $0x98] sm:$0xf]
    %v91 = vld [vmem:[#allocation2 + $0x9c] sm:$0xf]
    %v92 = vld [vmem:[#allocation2 + $0xa0] sm:$0xf]
    %v93 = vld [vmem:[#allocation2 + $0xa4] sm:$0xf]
    %v94 = vld [vmem:[#allocation2 + $0xa8] sm:$0xf]
    %v95 = vld [vmem:[#allocation2 + $0xac] sm:$0xf]
    %v96 = vld [vmem:[#allocation2 + $0xb0] sm:$0xf]
    %v97 = vld [vmem:[#allocation2 + $0xb4] sm:$0xf]
    %v98 = vld [vmem:[#allocation2 + $0xb8] sm:$0xf]
    %v99 = vld [vmem:[#allocation2 + $0xbc] sm:$0xf]
    %v100 = vld [vmem:[#allocation2 + $0xc0] sm:$0xf]
    %v101 = vld [vmem:[#allocation2 + $0xc4] sm:$0xf]
    %v102 = vld [vmem:[#allocation5] sm:$0xff]
    %v103 = vld [vmem:[#allocation5 + $0x8] sm:$0xff]
    %v104 = vld [vmem:[#allocation5 + $0x10] sm:$0xff]
    %v105 = vld [vmem:[#allocation5 + $0x18] sm:$0xff]
    %v106 = vld [vmem:[#allocation5 + $0x20] sm:$0xff]
    %v107 = vld [vmem:[#allocation5 + $0x28] sm:$0xff]
    %v108 = vld [vmem:[#allocation5 + $0x30] sm:$0xff]
    %v109 = vld [vmem:[#allocation5 + $0x38] sm:$0xff]
    %v110 = vld [vmem:[#allocation5 + $0x40] sm:$0xff]
    %v111 = vld [vmem:[#allocation5 + $0x48] sm:$0xff]
    %v112 = vld [vmem:[#allocation5 + $0x50] sm:$0xff]
    %v113 = vld [vmem:[#allocation5 + $0x58] sm:$0xff]
    %v114 = vld [vmem:[#allocation5 + $0x60] sm:$0xff]
    %v115 = vld [vmem:[#allocation5 + $0x68] sm:$0xff]
    %v116 = vld [vmem:[#allocation5 + $0x70] sm:$0xff]
    %v117 = vld [vmem:[#allocation5 + $0x78] sm:$0xff]
    %v118 = vld [vmem:[%s3] ss:$0 sm:$0xff]
    %s119 = scalar_lea.vmem %s3, 1
    %v120 = vld [vmem:[%s119] ss:$8 sm:$0x3]
    %v121 = vld [vmem:[%s3 + $0x2] ss:$0 sm:$0xff]
    %v122 = vld [vmem:[%s3 + $0x3] ss:$0 sm:$0xff]
    %v125 = vunpack.c.l.b16 %v52
    %v126 = vunpack.c.l.b16 %v53
    %v127 = vpack.c.b16 %v126, %v125
    %vm129 = vcmask 130048
    %v131 = vsel %vm129, %v51, 0
    %133 = vmatpush.bf16.msra.mxu0 0
    %134 = vmatpush.bf16.msra.mxu0 0
    %135 = vmatpush.bf16.msra.mxu0 0
    %136 = vmatpush.bf16.msra.mxu0 0
    %137 = vmatpush.bf16.msra.mxu0 0
    %138 = vmatpush.bf16.msra.mxu0 0
    %139 = vmatpush.bf16.msra.mxu0 0
    %140 = vmatpush.bf16.msra.mxu0 %v127
    %141 = vmatmul.bf16.gmra.mxu0 %v131
    %v142 = vpop.f32.mrf.mxu0
    %v143 = vadd.f32 %v122, %v142
    %v144 = vpop.f32.mrf.mxu0
    %145 = vdwg.mxu0
    %v146 = vmax.f32 %v143, 0.0
    %v147 = vpack.c.bf16 %v146, %v146
    %v164 = vunpack.c.l.b16 %v54
    %v165 = vunpack.c.l.b16 %v55
    %v166 = vunpack.c.l.b16 %v56
    %v167 = vunpack.c.l.b16 %v57
    %v168 = vunpack.c.l.b16 %v58
    %v169 = vunpack.c.l.b16 %v59
    %v170 = vunpack.c.l.b16 %v60
    %v171 = vunpack.c.l.b16 %v61
    %v172 = vunpack.c.l.b16 %v62
    %v173 = vunpack.c.l.b16 %v63
    %v174 = vunpack.c.l.b16 %v64
    %v175 = vunpack.c.l.b16 %v65
    %v176 = vunpack.c.l.b16 %v66
    %v177 = vunpack.c.l.b16 %v67
    %v178 = vunpack.c.l.b16 %v68
    %v179 = vunpack.c.l.b16 %v69
    %v180 = vpack.c.b16 %v165, %v164
    %v181 = vpack.c.b16 %v167, %v166
    %v182 = vpack.c.b16 %v169, %v168
    %v183 = vpack.c.b16 %v171, %v170
    %v184 = vpack.c.b16 %v173, %v172
    %v185 = vpack.c.b16 %v175, %v174
    %v186 = vpack.c.b16 %v177, %v176
    %v187 = vpack.c.b16 %v179, %v178
    %196 = vmatpush.bf16.msra.mxu0 %v187
    %197 = vmatpush.bf16.msra.mxu0 %v186
    %198 = vmatpush.bf16.msra.mxu0 %v185
    %199 = vmatpush.bf16.msra.mxu0 %v184
    %200 = vmatpush.bf16.msra.mxu0 %v183
    %201 = vmatpush.bf16.msra.mxu0 %v182
    %202 = vmatpush.bf16.msra.mxu0 %v181
    %203 = vmatpush.bf16.msra.mxu0 %v180
    %204 = vmatmul.bf16.gmra.mxu0 %v147
    %v205 = vpop.f32.mrf.mxu0
    %v206 = vadd.f32 %v118, %v205
    %v207 = vpop.f32.mrf.mxu0
    %208 = vdwg.mxu0
    %v209 = vmax.f32 %v206, 0.0
    %v210 = vpack.c.bf16 %v209, %v209
    %v212 = vperm.slane %v120, 0
    %v213 = vperm.slane %v120, 1
    %v232 = vunpack.c.l.b16 %v102
    %v233 = vunpack.c.h.b16 %v102
    %v234 = vunpack.c.l.b16 %v103
    %v235 = vunpack.c.h.b16 %v103
    %v236 = vunpack.c.l.b16 %v104
    %v237 = vunpack.c.h.b16 %v104
    %v238 = vunpack.c.l.b16 %v105
    %v239 = vunpack.c.h.b16 %v105
    %v240 = vunpack.c.l.b16 %v106
    %v241 = vunpack.c.h.b16 %v106
    %v242 = vunpack.c.l.b16 %v107
    %v243 = vunpack.c.h.b16 %v107
    %v244 = vunpack.c.l.b16 %v108
    %v245 = vunpack.c.h.b16 %v108
    %v246 = vunpack.c.l.b16 %v109
    %v247 = vunpack.c.h.b16 %v109
    %v248 = vunpack.c.l.b16 %v110
    %v249 = vunpack.c.h.b16 %v110
    %v250 = vunpack.c.l.b16 %v111
    %v251 = vunpack.c.h.b16 %v111
    %v252 = vunpack.c.l.b16 %v112
    %v253 = vunpack.c.h.b16 %v112
    %v254 = vunpack.c.l.b16 %v113
    %v255 = vunpack.c.h.b16 %v113
    %v256 = vunpack.c.l.b16 %v114
    %v257 = vunpack.c.h.b16 %v114
    %v258 = vunpack.c.l.b16 %v115
    %v259 = vunpack.c.h.b16 %v115
    %v260 = vunpack.c.l.b16 %v116
    %v261 = vunpack.c.h.b16 %v116
    %v262 = vunpack.c.l.b16 %v117
    %v263 = vunpack.c.h.b16 %v117
    %v264 = vpack.c.b16 %v234, %v232
    %v265 = vpack.c.b16 %v235, %v233
    %v266 = vpack.c.b16 %v238, %v236
    %v267 = vpack.c.b16 %v239, %v237
    %v268 = vpack.c.b16 %v242, %v240
    %v269 = vpack.c.b16 %v243, %v241
    %v270 = vpack.c.b16 %v246, %v244
    %v271 = vpack.c.b16 %v247, %v245
    %v272 = vpack.c.b16 %v250, %v248
    %v273 = vpack.c.b16 %v251, %v249
    %v274 = vpack.c.b16 %v254, %v252
    %v275 = vpack.c.b16 %v255, %v253
    %v276 = vpack.c.b16 %v258, %v256
    %v277 = vpack.c.b16 %v259, %v257
    %v278 = vpack.c.b16 %v262, %v260
    %v279 = vpack.c.b16 %v263, %v261
    %296 = vmatpush.bf16.msra.mxu0 %v278
    %297 = vmatpush.bf16.msra.mxu0 %v276
    %298 = vmatpush.bf16.msra.mxu0 %v274
    %299 = vmatpush.bf16.msra.mxu0 %v272
    %300 = vmatpush.bf16.msra.mxu0 %v270
    %301 = vmatpush.bf16.msra.mxu0 %v268
    %302 = vmatpush.bf16.msra.mxu0 %v266
    %303 = vmatpush.bf16.msra.mxu0 %v264
    %304 = vmatmul.bf16.gmra.mxu0 %v210
    %v305 = vpop.f32.mrf.mxu0
    %v306 = vadd.f32 %v212, %v305
    %v307 = vpop.f32.mrf.mxu0
    %308 = vdwg.mxu0
    %309 = vmatpush.bf16.msra.mxu0 %v279
    %310 = vmatpush.bf16.msra.mxu0 %v277
    %311 = vmatpush.bf16.msra.mxu0 %v275
    %312 = vmatpush.bf16.msra.mxu0 %v273
    %313 = vmatpush.bf16.msra.mxu0 %v271
    %314 = vmatpush.bf16.msra.mxu0 %v269
    %315 = vmatpush.bf16.msra.mxu0 %v267
    %316 = vmatpush.bf16.msra.mxu0 %v265
    %317 = vmatmul.bf16.gmra.mxu0 %v210
    %v318 = vpop.f32.mrf.mxu0
    %v319 = vadd.f32 %v213, %v318
    %v320 = vpop.f32.mrf.mxu0
    %321 = vdwg.mxu0
    %v322 = vmax.f32 %v306, 0.0
    %v323 = vmax.f32 %v319, 0.0
    %v324 = vpack.c.bf16 %v322, %v322
    %v325 = vpack.c.bf16 %v323, %v323
    %v358 = vunpack.c.l.b16 %v70
    %v359 = vunpack.c.l.b16 %v71
    %v360 = vunpack.c.l.b16 %v72
    %v361 = vunpack.c.l.b16 %v73
    %v362 = vunpack.c.l.b16 %v74
    %v363 = vunpack.c.l.b16 %v75
    %v364 = vunpack.c.l.b16 %v76
    %v365 = vunpack.c.l.b16 %v77
    %v366 = vunpack.c.l.b16 %v78
    %v367 = vunpack.c.l.b16 %v79
    %v368 = vunpack.c.l.b16 %v80
    %v369 = vunpack.c.l.b16 %v81
    %v370 = vunpack.c.l.b16 %v82
    %v371 = vunpack.c.l.b16 %v83
    %v372 = vunpack.c.l.b16 %v84
    %v373 = vunpack.c.l.b16 %v85
    %v374 = vunpack.c.l.b16 %v86
    %v375 = vunpack.c.l.b16 %v87
    %v376 = vunpack.c.l.b16 %v88
    %v377 = vunpack.c.l.b16 %v89
    %v378 = vunpack.c.l.b16 %v90
    %v379 = vunpack.c.l.b16 %v91
    %v380 = vunpack.c.l.b16 %v92
    %v381 = vunpack.c.l.b16 %v93
    %v382 = vunpack.c.l.b16 %v94
    %v383 = vunpack.c.l.b16 %v95
    %v384 = vunpack.c.l.b16 %v96
    %v385 = vunpack.c.l.b16 %v97
    %v386 = vunpack.c.l.b16 %v98
    %v387 = vunpack.c.l.b16 %v99
    %v388 = vunpack.c.l.b16 %v100
    %v389 = vunpack.c.l.b16 %v101
    %v390 = vpack.c.b16 %v359, %v358
    %v391 = vpack.c.b16 %v361, %v360
    %v392 = vpack.c.b16 %v363, %v362
    %v393 = vpack.c.b16 %v365, %v364
    %v394 = vpack.c.b16 %v367, %v366
    %v395 = vpack.c.b16 %v369, %v368
    %v396 = vpack.c.b16 %v371, %v370
    %v397 = vpack.c.b16 %v373, %v372
    %v398 = vpack.c.b16 %v375, %v374
    %v399 = vpack.c.b16 %v377, %v376
    %v400 = vpack.c.b16 %v379, %v378
    %v401 = vpack.c.b16 %v381, %v380
    %v402 = vpack.c.b16 %v383, %v382
    %v403 = vpack.c.b16 %v385, %v384
    %v404 = vpack.c.b16 %v387, %v386
    %v405 = vpack.c.b16 %v389, %v388
    %422 = vmatpush.bf16.msra.mxu0 %v397
    %423 = vmatpush.bf16.msra.mxu0 %v396
    %424 = vmatpush.bf16.msra.mxu0 %v395
    %425 = vmatpush.bf16.msra.mxu0 %v394
    %426 = vmatpush.bf16.msra.mxu0 %v393
    %427 = vmatpush.bf16.msra.mxu0 %v392
    %428 = vmatpush.bf16.msra.mxu0 %v391
    %429 = vmatpush.bf16.msra.mxu0 %v390
    %430 = vmatmul.bf16.gmra.mxu0 %v324
    %v431 = vpop.f32.mrf.mxu0
    %v432 = vadd.f32 %v121, %v431
    %v433 = vpop.f32.mrf.mxu0
    %434 = vdwg.mxu0
    %435 = vmatpush.bf16.msra.mxu0 %v405
    %436 = vmatpush.bf16.msra.mxu0 %v404
    %437 = vmatpush.bf16.msra.mxu0 %v403
    %438 = vmatpush.bf16.msra.mxu0 %v402
    %439 = vmatpush.bf16.msra.mxu0 %v401
    %440 = vmatpush.bf16.msra.mxu0 %v400
    %441 = vmatpush.bf16.msra.mxu0 %v399
    %442 = vmatpush.bf16.msra.mxu0 %v398
    %443 = vmatmul.bf16.gmra.mxu0 %v325
    %v444 = vpop.f32.mrf.mxu0
    %v445 = vadd.f32 %v432, %v444
    %v446 = vpop.f32.mrf.mxu0
    %447 = vdwg.mxu0
    %v448 = vpack.c.bf16 %v445, %v445
    %449 = vst [vmem:[#allocation7] sm:$0xf] %v448
    // Predicated region
    $region26: #{dueling_dqn_forward_padded.1} parent=1 // pred_check
      _
    $region27: #{dueling_dqn_forward_padded.1} parent=1 // pred_check_branch
      %451 = sbr.rel (0) target = $region29
    $region28: #{dueling_dqn_forward_padded.1} parent=1 // pred_region
      %453 = vsyncadd [#allocation4], 0
      %s455 = sshll.u32 [#allocation7], 4
      %s456 = int_to_ptr.vmem [resolvable:$true] %s455
      %s457 = sshll.u32 %s4, 4
      %s458 = int_to_ptr.hbm [resolvable:$true] %s457
      %460 = dma.vmem_to_hbm [thread:$0]  %s456, 64, %s458, [#allocation4]
    $region29: #{dueling_dqn_forward_padded.1} parent=1 // pred_fallthru
      _
    // Predicated region
    $region30: #{dueling_dqn_forward_padded.1} parent=1 // pred_check
      _
    $region31: #{dueling_dqn_forward_padded.1} parent=1 // pred_check_branch
      %462 = sbr.rel (0) target = $region33
    $region32: #{dueling_dqn_forward_padded.1} parent=1 // pred_region
      %464 = dma.done [#allocation4], 64
    $region33: #{dueling_dqn_forward_padded.1} parent=1 // pred_fallthru
      _
    %465 = vsyncpa [#allocation3], 1
    %466 = vsyncpa [#allocation6], 1
    %467 = vsyncpa [#allocation4], 1

</llo_original>
